<compile_context>
chip_gen: v7x
topology: tpu7x:2x2x1
jax: 0.10.0
libtpu: 0.0.40
codegen_flags: <defaults>
</compile_context>

<pallas_src>
import jax
import jax.numpy as jnp
from jax.experimental import pallas as pl
from jax.experimental.pallas import tpu as pltpu


def parallel_linear_kernel(x_ref, y_ref, w1_ref, w2_ref, b_ref, o_ref):
    # Two MXU matmuls (bf16 operands, f32 accumulation), one VPU bias add,
    # one store.  Both RHS operands are already (K, N) -> no in-kernel
    # transpose, no XLU work.
    acc = jnp.dot(x_ref[...], w1_ref[...], preferred_element_type=jnp.float32)
    acc = acc + jnp.dot(y_ref[...], w2_ref[...], preferred_element_type=jnp.float32)
    o_ref[...] = acc + b_ref[...]


def parallel_linear(x, y, w1, b1, w2, b2):
    batch, input_size = x.shape
    output_size = w1.shape[0]

    # ---- one-time parameter prep (module init in practice) ------------------
    w1t = w1.T.astype(jnp.bfloat16)                       # (K, N)
    w2t = w2.T.astype(jnp.bfloat16)                       # (K, N)
    bias = (b1 + b2).reshape(1, output_size).astype(jnp.float32)

    # ---- per-call activation prep: just the bf16 cast (no concat / pad) -----
    xb = x.astype(jnp.bfloat16)
    yb = y.astype(jnp.bfloat16)

    # ---- tiling --------------------------------------------------------------
    # Rows: full batch when it fits a single tile, else 256-row tiles; Pallas
    # masks the final partial tile so any batch is legal (no assert).
    # Columns: tile N so v7x's two TensorCores can split output columns when
    # output_size is large; 256-wide tiles keep stores lane-dense and fill the
    # 256-wide MXU on v6e/v7x.
    tile_m = batch if batch <= 256 else 256
    tile_n = output_size if output_size <= 256 else 256
    grid = (pl.cdiv(batch, tile_m), pl.cdiv(output_size, tile_n))

    # TODO(synk): for very large input_size*output_size add a K grid axis with
    # an f32 VMEM accumulator (pl.when init/finalize) so the resident weight
    # tiles stay inside v7x's 64 MiB VMEM; unnecessary at these sizes.
    return pl.pallas_call(
        parallel_linear_kernel,
        out_shape=jax.ShapeDtypeStruct((batch, output_size), jnp.float32),
        grid=grid,
        in_specs=[
            pl.BlockSpec((tile_m, input_size), lambda i, j: (i, 0)),   # x rows
            pl.BlockSpec((tile_m, input_size), lambda i, j: (i, 0)),   # y rows
            pl.BlockSpec((input_size, tile_n), lambda i, j: (0, j)),   # W1.T cols
            pl.BlockSpec((input_size, tile_n), lambda i, j: (0, j)),   # W2.T cols
            pl.BlockSpec((1, tile_n), lambda i, j: (0, j)),            # fused bias
        ],
        out_specs=pl.BlockSpec((tile_m, tile_n), lambda i, j: (i, j)),
        compiler_params=pltpu.CompilerParams(
            dimension_semantics=("parallel", "parallel"),
        ),
    )(xb, yb, w1t, w2t, bias)


def reference(x, y, w1, b1, w2, b2):
    a = x @ w1.T + b1
    b = y @ w2.T + b2
    return a + b


if __name__ == "__main__":
    input_size = 32
    output_size = 32
    batch = 8

    key = jax.random.PRNGKey(0)
    kx, ky, kw1, kb1, kw2, kb2 = jax.random.split(key, 6)

    # torch.rand -> uniform [0, 1): mirror with jax.random.uniform.
    x = jax.random.uniform(kx, (batch, input_size), dtype=jnp.float32)
    y = jax.random.uniform(ky, (batch, input_size), dtype=jnp.float32)
    w1 = jax.random.uniform(kw1, (output_size, input_size), dtype=jnp.float32)
    b1 = jax.random.uniform(kb1, (output_size,), dtype=jnp.float32)
    w2 = jax.random.uniform(kw2, (output_size, input_size), dtype=jnp.float32)
    b2 = jax.random.uniform(kb2, (output_size,), dtype=jnp.float32)

    out = parallel_linear(x, y, w1, b1, w2, b2)
    jax.block_until_ready(out)

    ref = reference(x, y, w1, b1, w2, b2)
    assert out.shape == (batch, output_size)
    # bf16 operands (f32 accumulation) -> tolerance relaxed vs. the f32 reference.
    assert jnp.allclose(out, ref, atol=2e-2, rtol=2e-2), "mismatch vs reference"

    print("KERNEL_OK")
</pallas_src>

<mosaic_0001>
module attributes {stable_mosaic.version = 11 : i64} {
  func.func @parallel_linear_kernel(%arg0: i32, %arg1: i32, %arg2: memref<8x32xbf16, #tpu.memory_space<vmem>>, %arg3: memref<8x32xbf16, #tpu.memory_space<vmem>>, %arg4: memref<32x32xbf16, #tpu.memory_space<vmem>>, %arg5: memref<32x32xbf16, #tpu.memory_space<vmem>>, %arg6: memref<1x32xf32, #tpu.memory_space<vmem>>, %arg7: memref<8x32xf32, #tpu.memory_space<vmem>>) attributes {dimension_semantics = [#tpu.dimension_semantics<parallel>, #tpu.dimension_semantics<parallel>], iteration_bounds = array<i64: 1, 1>, scalar_prefetch = 0 : i64, scratch_operands = 0 : i64, tpu.core_type = #tpu.core_type<tc>, window_params = [{transform_indices = @transform_0, window_bounds = array<i64: 8, 32>}, {transform_indices = @transform_1, window_bounds = array<i64: 8, 32>}, {transform_indices = @transform_2, window_bounds = array<i64: 32, 32>}, {transform_indices = @transform_3, window_bounds = array<i64: 32, 32>}, {transform_indices = @transform_4, window_bounds = array<i64: 1, 32>}, {transform_indices = @transform_5, window_bounds = array<i64: 8, 32>}]} {
    %c0 = arith.constant 0 : index
    %c0_0 = arith.constant 0 : index
    %0 = vector.load %arg2[%c0, %c0_0] : memref<8x32xbf16, #tpu.memory_space<vmem>>, vector<8x32xbf16>
    %c0_1 = arith.constant 0 : index
    %c0_2 = arith.constant 0 : index
    %1 = vector.load %arg4[%c0_1, %c0_2] : memref<32x32xbf16, #tpu.memory_space<vmem>>, vector<32x32xbf16>
    %cst = arith.constant dense<0.000000e+00> : vector<8x32xf32>
    %2 = tpu.matmul %0, %1, %cst {dimension_numbers = #tpu.dot_dimension_numbers<[1], [0], [0], [1], [0, 0, 1, 1], [], []>} : vector<8x32xbf16>, vector<32x32xbf16>, vector<8x32xf32> -> vector<8x32xf32>
    %c0_3 = arith.constant 0 : index
    %c0_4 = arith.constant 0 : index
    %3 = vector.load %arg3[%c0_3, %c0_4] : memref<8x32xbf16, #tpu.memory_space<vmem>>, vector<8x32xbf16>
    %c0_5 = arith.constant 0 : index
    %c0_6 = arith.constant 0 : index
    %4 = vector.load %arg5[%c0_5, %c0_6] : memref<32x32xbf16, #tpu.memory_space<vmem>>, vector<32x32xbf16>
    %cst_7 = arith.constant dense<0.000000e+00> : vector<8x32xf32>
    %5 = tpu.matmul %3, %4, %cst_7 {dimension_numbers = #tpu.dot_dimension_numbers<[1], [0], [0], [1], [0, 0, 1, 1], [], []>} : vector<8x32xbf16>, vector<32x32xbf16>, vector<8x32xf32> -> vector<8x32xf32>
    %6 = arith.addf %2, %5 : vector<8x32xf32>
    %c0_8 = arith.constant 0 : index
    %c0_9 = arith.constant 0 : index
    %7 = vector.load %arg6[%c0_8, %c0_9] : memref<1x32xf32, #tpu.memory_space<vmem>>, vector<1x32xf32>
    %8 = vector.broadcast %7 : vector<1x32xf32> to vector<8x32xf32>
    %9 = arith.addf %6, %8 : vector<8x32xf32>
    %c0_10 = arith.constant 0 : index
    %c0_11 = arith.constant 0 : index
    %10 = vector.load %arg7[%c0_10, %c0_11] : memref<8x32xf32, #tpu.memory_space<vmem>>, vector<8x32xf32>
    tpu.vector_store %arg7[%c0_10, %c0_11], %9 {strides = array<i32>} : memref<8x32xf32, #tpu.memory_space<vmem>>, vector<8x32xf32>,
    return
  }
  func.func @transform_0(%arg0: i32, %arg1: i32) -> (i32, i32) {
    %c0_i32 = arith.constant 0 : i32
    %c0_i32_0 = arith.constant 0 : i32
    return %arg0, %c0_i32 : i32, i32
  }
  func.func @transform_1(%arg0: i32, %arg1: i32) -> (i32, i32) {
    %c0_i32 = arith.constant 0 : i32
    %c0_i32_0 = arith.constant 0 : i32
    return %arg0, %c0_i32 : i32, i32
  }
  func.func @transform_2(%arg0: i32, %arg1: i32) -> (i32, i32) {
    %c0_i32 = arith.constant 0 : i32
    %c0_i32_0 = arith.constant 0 : i32
    return %c0_i32, %arg1 : i32, i32
  }
  func.func @transform_3(%arg0: i32, %arg1: i32) -> (i32, i32) {
    %c0_i32 = arith.constant 0 : i32
    %c0_i32_0 = arith.constant 0 : i32
    return %c0_i32, %arg1 : i32, i32
  }
  func.func @transform_4(%arg0: i32, %arg1: i32) -> (i32, i32) {
    %c0_i32 = arith.constant 0 : i32
    %c0_i32_0 = arith.constant 0 : i32
    return %c0_i32, %arg1 : i32, i32
  }
  func.func @transform_5(%arg0: i32, %arg1: i32) -> (i32, i32) {
    %c0_i32 = arith.constant 0 : i32
    return %arg0, %arg1 : i32, i32
  }
}

</mosaic_0001>

<llo_original>
// kernel: tpu_custom_call.1
$region0: #{tpu_custom_call.1}
  #allocation0 [shape = 'u32[]', space=smem, size = 0x4, offset = 0x4, fixed_abs, tag = 'smem constant byte address 0x4 - core index']
  #allocation1 [shape = 'u32[144,128]{1,0:T(1,128)}', space=vmem, size = 0x12000, scoped, tag = 'internal scratch']
  %s0 = inlined_call_operand.hbm [shape: bf16[8,32], index: 0, kind: input, shape index: {}]
  %s1 = inlined_call_operand.hbm [shape: bf16[8,32], index: 1, kind: input, shape index: {}]
  %s2 = inlined_call_operand.hbm [shape: bf16[32,32], index: 2, kind: input, shape index: {}]
  %s3 = inlined_call_operand.hbm [shape: bf16[32,32], index: 3, kind: input, shape index: {}]
  %s4 = inlined_call_operand.vmem [shape: f32[1,32], index: 4, kind: input, shape index: {}]
  %s5 = inlined_call_operand.hbm [shape: f32[8,32], index: 5, kind: output, shape index: {}]
  %s6 = sld [smem:[#allocation0]]
  $region46: #{tpu_custom_call.1} parent=0
    _
  %s8 = ssub.s32 1, %s6
  %s9 = scalar_select 0, %s8, %s6
  $region1: #{tpu_custom_call.1} parent=0
    #allocation2 [shape = 'u8[2048]{0}', space=vmem, size = 0x800, scoped, tag = 'input window, operand 0, single buffered']
    #allocation3 [shape = 's32[1]{0}', space=sflag, size = 0x4, scoped, tag = 'scoped memory for tpu_custom_call.1']
    #allocation4 [shape = 's32[1]{0}', space=sflag, size = 0x4, scoped, tag = 'scoped memory for tpu_custom_call.1']
    #allocation5 [shape = 'u8[2048]{0}', space=vmem, size = 0x800, scoped, tag = 'input window, operand 1, single buffered']
    #allocation6 [shape = 's32[1]{0}', space=sflag, size = 0x4, scoped, tag = 'scoped memory for tpu_custom_call.1']
    #allocation7 [shape = 'u8[8192]{0}', space=vmem, size = 0x2000, scoped, tag = 'input window, operand 2, single buffered']
    #allocation8 [shape = 'u8[8192]{0}', space=vmem, size = 0x2000, scoped, tag = 'input window, operand 3, single buffered']
    #allocation9 [shape = 's32[1]{0}', space=sflag, size = 0x4, scoped, tag = 'scoped memory for tpu_custom_call.1']
    #allocation10 [shape = 'u8[4096]{0}', space=vmem, size = 0x1000, scoped, tag = 'output window, operand 0, single buffered']
    %10 = vsyncpa [#allocation3], 0
    %11 = vsyncpa [#allocation6], 0
    %12 = vsyncpa [#allocation9], 0
    %13 = vsyncpa [#allocation4], 0
    // Predicated region
    $region2: #{tpu_custom_call.1} parent=1 // pred_check
      _
    $region3: #{tpu_custom_call.1} parent=1 // pred_check_branch
      %15 = sbr.rel (0) target = $region5
    $region4: #{tpu_custom_call.1} parent=1 // pred_region
      %s17 = ssub.s32 64, 64
      %18 = vsyncadd [#allocation3], %s17
      %s20 = sshll.u32 [#allocation2], 4
      %s21 = int_to_ptr.vmem [resolvable:$true] %s20
      %23 = dma.hbm_to_vmem [thread:$0]  %s0, 64, %s21, [#allocation3]
    $region5: #{tpu_custom_call.1} parent=1 // pred_fallthru
      _
    // Predicated region
    $region6: #{tpu_custom_call.1} parent=1 // pred_check
      _
    $region7: #{tpu_custom_call.1} parent=1 // pred_check_branch
      %25 = sbr.rel (0) target = $region9
    $region8: #{tpu_custom_call.1} parent=1 // pred_region
      %s27 = ssub.s32 64, 64
      %28 = vsyncadd [#allocation6], %s27
      %s30 = sshll.u32 [#allocation5], 4
      %s31 = int_to_ptr.vmem [resolvable:$true] %s30
      %33 = dma.hbm_to_vmem [thread:$0]  %s1, 64, %s31, [#allocation6]
    $region9: #{tpu_custom_call.1} parent=1 // pred_fallthru
      _
    // Predicated region
    $region10: #{tpu_custom_call.1} parent=1 // pred_check
      _
    $region11: #{tpu_custom_call.1} parent=1 // pred_check_branch
      %35 = sbr.rel (0) target = $region13
    $region12: #{tpu_custom_call.1} parent=1 // pred_region
      %s37 = ssub.s32 256, 256
      %38 = vsyncadd [#allocation6], %s37
      %s39 = sshll.u32 [#allocation7], 4
      %s40 = int_to_ptr.vmem [resolvable:$true] %s39
      %45 = dma.hbm_to_vmem [thread:$0]  %s2, 256, %s40, [#allocation6], 64, 64, 4
    $region13: #{tpu_custom_call.1} parent=1 // pred_fallthru
      _
    // Predicated region
    $region14: #{tpu_custom_call.1} parent=1 // pred_check
      _
    $region15: #{tpu_custom_call.1} parent=1 // pred_check_branch
      %47 = sbr.rel (0) target = $region17
    $region16: #{tpu_custom_call.1} parent=1 // pred_region
      %s49 = ssub.s32 256, 256
      %50 = vsyncadd [#allocation9], %s49
      %s51 = sshll.u32 [#allocation8], 4
      %s52 = int_to_ptr.vmem [resolvable:$true] %s51
      %57 = dma.hbm_to_vmem [thread:$0]  %s3, 256, %s52, [#allocation9], 64, 64, 4
    $region17: #{tpu_custom_call.1} parent=1 // pred_fallthru
      _
    // Predicated region
    $region18: #{tpu_custom_call.1} parent=1 // pred_check
      _
    $region19: #{tpu_custom_call.1} parent=1 // pred_check_branch
      %59 = sbr.rel (0) target = $region21
    $region20: #{tpu_custom_call.1} parent=1 // pred_region
      _
    $region21: #{tpu_custom_call.1} parent=1 // pred_fallthru
      _
    // Predicated region
    $region22: #{tpu_custom_call.1} parent=1 // pred_check
      _
    $region23: #{tpu_custom_call.1} parent=1 // pred_check_branch
      %61 = sbr.rel (0) target = $region25
    $region24: #{tpu_custom_call.1} parent=1 // pred_region
      %62 = dma.done [#allocation3], 64
    $region25: #{tpu_custom_call.1} parent=1 // pred_fallthru
      _
    // Predicated region
    $region26: #{tpu_custom_call.1} parent=1 // pred_check
      _
    $region27: #{tpu_custom_call.1} parent=1 // pred_check_branch
      %64 = sbr.rel (0) target = $region29
    $region28: #{tpu_custom_call.1} parent=1 // pred_region
      %65 = dma.done [#allocation6], 64
    $region29: #{tpu_custom_call.1} parent=1 // pred_fallthru
      _
    // Predicated region
    $region30: #{tpu_custom_call.1} parent=1 // pred_check
      _
    $region31: #{tpu_custom_call.1} parent=1 // pred_check_branch
      %67 = sbr.rel (0) target = $region33
    $region32: #{tpu_custom_call.1} parent=1 // pred_region
      %68 = dma.done [#allocation6], 256
    $region33: #{tpu_custom_call.1} parent=1 // pred_fallthru
      _
    // Predicated region
    $region34: #{tpu_custom_call.1} parent=1 // pred_check
      _
    $region35: #{tpu_custom_call.1} parent=1 // pred_check_branch
      %70 = sbr.rel (0) target = $region37
    $region36: #{tpu_custom_call.1} parent=1 // pred_region
      %71 = dma.done [#allocation9], 256
    $region37: #{tpu_custom_call.1} parent=1 // pred_fallthru
      _
    %v73 = vld [vmem:[#allocation2] sm:$0xf]
    %v74 = vld [vmem:[#allocation7] sm:$0xf]
    %v75 = vld [vmem:[#allocation7 + $0x4] sm:$0xf]
    %v76 = vld [vmem:[#allocation7 + $0x8] sm:$0xf]
    %v77 = vld [vmem:[#allocation7 + $0xc] sm:$0xf]
    %v78 = vld [vmem:[#allocation5] sm:$0xf]
    %v79 = vld [vmem:[#allocation8] sm:$0xf]
    %v80 = vld [vmem:[#allocation8 + $0x4] sm:$0xf]
    %v81 = vld [vmem:[#allocation8 + $0x8] sm:$0xf]
    %v82 = vld [vmem:[#allocation8 + $0xc] sm:$0xf]
    %v87 = vunpack.c.l.b16 %v79
    %v88 = vunpack.c.l.b16 %v80
    %v89 = vunpack.c.l.b16 %v81
    %v90 = vunpack.c.l.b16 %v82
    %v91 = vpack.c.b16 %v88, %v87
    %v92 = vpack.c.b16 %v90, %v89
    %vm95 = vcmask 261120
    %v97 = vsel %vm95, %v78, 0
    %99 = vmatprep.subr.bf16.mxu0 0
    %100 = vmatpush1.bf16.msra.mxu0 %v91
    %101 = vmatprep.subr.bf16.mxu0 0
    %102 = vmatpush1.bf16.msra.mxu0 %v92
    %103 = vmatprep.subr.bf16.mxu0 0
    %104 = vmatpush1.bf16.msra.mxu0 0
    %105 = vmatprep.subr.bf16.mxu0 0
    %106 = vmatpush1.bf16.msra.mxu0 0
    %107 = vmatprep.subr.bf16.mxu0 0
    %108 = vmatpush1.bf16.msra.mxu0 0
    %109 = vmatprep.subr.bf16.mxu0 0
    %110 = vmatpush1.bf16.msra.mxu0 0
    %111 = vmatprep.subr.bf16.mxu0 0
    %112 = vmatpush1.bf16.msra.mxu0 0
    %113 = vmatprep.subr.bf16.mxu0 0
    %114 = vmatpush1.bf16.msra.mxu0 0
    %115 = vmatprep.subr.bf16.mxu0 0
    %116 = vmatpush1.bf16.msra.mxu0 0
    %117 = vmatprep.subr.bf16.mxu0 0
    %118 = vmatpush1.bf16.msra.mxu0 0
    %119 = vmatprep.subr.bf16.mxu0 0
    %120 = vmatpush1.bf16.msra.mxu0 0
    %121 = vmatprep.subr.bf16.mxu0 0
    %122 = vmatpush1.bf16.msra.mxu0 0
    %123 = vmatprep.subr.bf16.mxu0 0
    %124 = vmatpush1.bf16.msra.mxu0 0
    %125 = vmatprep.subr.bf16.mxu0 0
    %126 = vmatpush1.bf16.msra.mxu0 0
    %127 = vmatprep.subr.bf16.mxu0 0
    %128 = vmatpush1.bf16.msra.mxu0 0
    %129 = vmatprep.subr.bf16.mxu0 0
    %130 = vmatpush1.bf16.msra.mxu0 0
    %131 = vmatprep.mubr.bf16.mxu0 0
    %132 = vmatmul.mubr.bf16.gmra.mrb[0].mxu0 %v97
    %v133 = vpop.f32.mrb[0].mxu0
    %v134 = vadd.f32 0.0, %v133
    %v135 = vpop.f32.mrb[0].mxu0
    %v136 = vpop.f32.mrb[0].mxu0
    %v137 = vpop.f32.mrb[0].mxu0
    %138 = vdwg.mxu0
    %v143 = vunpack.c.l.b16 %v74
    %v144 = vunpack.c.l.b16 %v75
    %v145 = vunpack.c.l.b16 %v76
    %v146 = vunpack.c.l.b16 %v77
    %v147 = vpack.c.b16 %v144, %v143
    %v148 = vpack.c.b16 %v146, %v145
    %v152 = vsel %vm95, %v73, 0
    %154 = vmatprep.subr.bf16.mxu0 0
    %155 = vmatpush1.bf16.msra.mxu0 %v147
    %156 = vmatprep.subr.bf16.mxu0 0
    %157 = vmatpush1.bf16.msra.mxu0 %v148
    %158 = vmatprep.subr.bf16.mxu0 0
    %159 = vmatpush1.bf16.msra.mxu0 0
    %160 = vmatprep.subr.bf16.mxu0 0
    %161 = vmatpush1.bf16.msra.mxu0 0
    %162 = vmatprep.subr.bf16.mxu0 0
    %163 = vmatpush1.bf16.msra.mxu0 0
    %164 = vmatprep.subr.bf16.mxu0 0
    %165 = vmatpush1.bf16.msra.mxu0 0
    %166 = vmatprep.subr.bf16.mxu0 0
    %167 = vmatpush1.bf16.msra.mxu0 0
    %168 = vmatprep.subr.bf16.mxu0 0
    %169 = vmatpush1.bf16.msra.mxu0 0
    %170 = vmatprep.subr.bf16.mxu0 0
    %171 = vmatpush1.bf16.msra.mxu0 0
    %172 = vmatprep.subr.bf16.mxu0 0
    %173 = vmatpush1.bf16.msra.mxu0 0
    %174 = vmatprep.subr.bf16.mxu0 0
    %175 = vmatpush1.bf16.msra.mxu0 0
    %176 = vmatprep.subr.bf16.mxu0 0
    %177 = vmatpush1.bf16.msra.mxu0 0
    %178 = vmatprep.subr.bf16.mxu0 0
    %179 = vmatpush1.bf16.msra.mxu0 0
    %180 = vmatprep.subr.bf16.mxu0 0
    %181 = vmatpush1.bf16.msra.mxu0 0
    %182 = vmatprep.subr.bf16.mxu0 0
    %183 = vmatpush1.bf16.msra.mxu0 0
    %184 = vmatprep.subr.bf16.mxu0 0
    %185 = vmatpush1.bf16.msra.mxu0 0
    %186 = vmatprep.mubr.bf16.mxu0 0
    %187 = vmatmul.mubr.bf16.gmra.mrb[0].mxu0 %v152
    %v188 = vpop.f32.mrb[0].mxu0
    %v189 = vadd.f32 %v134, %v188
    %v190 = vpop.f32.mrb[0].mxu0
    %v191 = vpop.f32.mrb[0].mxu0
    %v192 = vpop.f32.mrb[0].mxu0
    %193 = vdwg.mxu0
    %v194 = vld [vmem:[%s4] sm:$0x1]
    %v196 = vlaneseq
    %v197 = vshrl.u32 %v196, 7
    %v198 = vsub.s32 0, %v197
    %v199 = vrot.slane %v194, %v198
    %v201 = vadd.f32 %v189, %v199
    %202 = vst.msk [vmem:[#allocation10] sm:$0xff] %vm95, %v201
    // Predicated region
    $region38: #{tpu_custom_call.1} parent=1 // pred_check
      _
    $region39: #{tpu_custom_call.1} parent=1 // pred_check_branch
      %204 = sbr.rel (0) target = $region41
    $region40: #{tpu_custom_call.1} parent=1 // pred_region
      %s206 = ssub.s32 128, 128
      %207 = vsyncadd [#allocation4], %s206
      %s209 = sshll.u32 [#allocation10], 4
      %s210 = int_to_ptr.vmem [resolvable:$true] %s209
      %212 = dma.vmem_to_hbm [thread:$0]  %s210, 128, %s5, [#allocation4]
    $region41: #{tpu_custom_call.1} parent=1 // pred_fallthru
      _
    // Predicated region
    $region42: #{tpu_custom_call.1} parent=1 // pred_check
      _
    $region43: #{tpu_custom_call.1} parent=1 // pred_check_branch
      %214 = sbr.rel (0) target = $region45
    $region44: #{tpu_custom_call.1} parent=1 // pred_region
      %215 = dma.done [#allocation4], 128
    $region45: #{tpu_custom_call.1} parent=1 // pred_fallthru
      _
    %216 = vsyncpa [#allocation3], 1
    %217 = vsyncpa [#allocation6], 1
    %218 = vsyncpa [#allocation9], 1
    %219 = vsyncpa [#allocation4], 1

</llo_original>
